<compile_context>
chip_gen: v7x
topology: tpu7x:2x2x1
jax: 0.10.0
libtpu: 0.0.40
codegen_flags: <defaults>
</compile_context>

<pallas_src>
import functools

import jax
import jax.numpy as jnp
from jax.experimental import pallas as pl
from jax.experimental.pallas import tpu as pltpu


def _dag_encoder_kernel(lo_ref, hi_ref, x_ref, hn_ref, w_ref, b_ref, out_ref,
                        *, total_nodes, mask_tail):
    c = pl.program_id(0)          # node-range split ("parallel" -> 2nd TC)
    i = pl.program_id(1)          # node tile within this split ("arbitrary")

    @pl.when(i == 0)
    def _():
        out_ref[...] = jnp.zeros_like(out_ref)

    tn = x_ref.shape[0]
    base = (c * pl.num_programs(1) + i) * tn          # first global node row

    # Fused concat + single K=(F+E) matmul (bf16 at the MXU, f32 accumulate).
    xh = jnp.concatenate([x_ref[...], hn_ref[...]], axis=1).astype(jnp.bfloat16)
    h = jnp.dot(xh, w_ref[...], preferred_element_type=jnp.float32)   # [TN, E]

    # Fused bias + LeakyReLU(0.2) epilogue in f32.
    h = h + b_ref[...]
    h = jnp.where(h > 0.0, h, 0.2 * h)

    if mask_tail:
        # Explicitly zero rows past the real node count: a partial boundary DMA
        # leaves garbage there, and 0-mask * NaN would still poison the scatter.
        row = base + jax.lax.broadcasted_iota(jnp.int32, (tn, 1), 0)   # [TN, 1]
        h = jnp.where(row < total_nodes, h, 0.0)

    h16 = h.astype(jnp.bfloat16)       # single live [TN,E] temp for the scatter

    # segment_csr(sum) as an MXU matmul: [G,TN] 0/1 membership mask @ [TN,E].
    # (For very small G a VPU masked-sum would keep the scatter f32-exact, but
    #  the bf16 matmul form scales with G and 0/1 is exact in bf16.)
    col = base + jax.lax.broadcasted_iota(jnp.int32, (1, tn), 1)       # [1, TN]
    mask = ((col >= lo_ref[...]) & (col < hi_ref[...])).astype(jnp.bfloat16)
    out_ref[...] += jnp.dot(mask, h16, preferred_element_type=jnp.float32)


@functools.partial(jax.jit, static_argnames=("tile_n", "num_splits"))
def _dag_encoder_forward_impl(x_nodes, h_node, ptr, w, b, tile_n, num_splits):
    n, f = x_nodes.shape
    e = w.shape[1]
    g = ptr.shape[0] - 1

    # Resident (tiny) parameters: fused weight, 2D bias, CSR segment bounds.
    w_cat = w.astype(jnp.bfloat16)                  # [F+E, E]
    b2d = b.reshape(1, e).astype(jnp.float32)       # [1, E]
    ptr = ptr.astype(jnp.int32)
    lo = ptr[:-1].reshape(g, 1)
    hi = ptr[1:].reshape(g, 1)
    # NOTE: nodes with index >= ptr[-1] contribute to no segment (matching
    # torch_scatter.segment_csr); callers should ensure ptr[-1] == N.

    # Node tiling: no physical padding / recasting of the [N, *] arrays -- the
    # last block may be ragged and is masked in-kernel.
    if n <= tile_n:
        tile_n_eff = n                              # full-extent block (any N)
    else:
        tile_n_eff = max(8, (tile_n // 8) * 8)      # sublane-aligned block
    n_tiles = -(-n // tile_n_eff)
    num_splits_eff = max(1, min(num_splits, n_tiles))
    tiles_per_split = -(-n_tiles // num_splits_eff)
    mask_tail = (n % tile_n_eff != 0) or (num_splits_eff * tiles_per_split != n_tiles)

    def node_block(c, i):
        # Clamp so wasted trailing tiles of the last split stay in bounds; their
        # rows are neutralized by the in-kernel validity mask.
        return (jnp.minimum(c * tiles_per_split + i, n_tiles - 1), 0)

    compiler_kwargs = dict(dimension_semantics=("parallel", "arbitrary"))
    est_vmem = 4 * tile_n_eff * (f + e) * 4         # 2x-buffered f32 inputs + temps
    if est_vmem > 12 * 1024 * 1024:
        compiler_kwargs["vmem_limit_bytes"] = int(min(est_vmem + (8 << 20), 60 << 20))

    kernel = functools.partial(_dag_encoder_kernel, total_nodes=n,
                               mask_tail=mask_tail)

    partials = pl.pallas_call(
        kernel,
        out_shape=jax.ShapeDtypeStruct((num_splits_eff, g, e), jnp.float32),
        grid_spec=pltpu.PrefetchScalarGridSpec(
            num_scalar_prefetch=0,
            grid=(num_splits_eff, tiles_per_split),
            in_specs=[
                pl.BlockSpec((g, 1), lambda c, i: (0, 0)),        # lo    (resident)
                pl.BlockSpec((g, 1), lambda c, i: (0, 0)),        # hi    (resident)
                pl.BlockSpec((tile_n_eff, f), node_block),        # x tile (f32)
                pl.BlockSpec((tile_n_eff, e), node_block),        # h_node tile (f32)
                pl.BlockSpec((f + e, e), lambda c, i: (0, 0)),    # W_cat (resident)
                pl.BlockSpec((1, e), lambda c, i: (0, 0)),        # bias  (resident)
            ],
            out_specs=pl.BlockSpec((None, g, e), lambda c, i: (c, 0, 0)),
        ),
        compiler_params=pltpu.CompilerParams(**compiler_kwargs),
    )(lo, hi, x_nodes, h_node, w_cat, b2d)

    if num_splits_eff == 1:
        return partials[0]
    return partials.sum(axis=0)        # tiny [num_splits, G, E] reduce


def _default_num_splits():
    """2 only where two TensorCores share the grid (v7x, v4/v5p megacore)."""
    try:
        kind = jax.devices()[0].device_kind.lower()
    except Exception:
        return 1
    return 2 if any(t in kind for t in ("v7", "v4", "v5p")) else 1


def dag_encoder_forward(x_nodes, h_node, ptr, w, b, *, tile_n=2048,
                        num_splits=None):
    """x_nodes: [N, F], h_node: [N, E], ptr: [G+1] int32 (ptr[-1] == N),
    w: [F+E, E], b: [E].  Returns [G, E] f32 segment sums of the activated MLP."""
    if num_splits is None:
        num_splits = _default_num_splits()
    return _dag_encoder_forward_impl(x_nodes, h_node, ptr, w, b,
                                     tile_n=int(tile_n),
                                     num_splits=int(num_splits))


def _reference(x_nodes, h_node, ptr, w, b):
    x_cat = jnp.concatenate([x_nodes, h_node], axis=1)
    h = x_cat @ w + b
    h = jnp.where(h > 0.0, h, 0.2 * h)
    n = x_cat.shape[0]
    g = ptr.shape[0] - 1
    node_idx = jnp.arange(n)
    seg_ids = jnp.sum(node_idx[:, None] >= ptr[None, 1:], axis=1)  # searchsorted
    return jax.ops.segment_sum(h, seg_ids, num_segments=g)


if __name__ == "__main__":
    # Module hyperparameters (hidden_dim is unused by forward, kept for fidelity).
    num_node_features = 6
    hidden_dim = 16
    embed_dim = 32
    input_dim = num_node_features + embed_dim

    # Graph batch: N = 12 nodes across G = 3 dags.
    N = 12
    ptr = jnp.array([0, 4, 9, 12], dtype=jnp.int32)

    key = jax.random.PRNGKey(0)
    k1, k2, k3, k4 = jax.random.split(key, 4)
    x_nodes = jax.random.normal(k1, (N, num_node_features), dtype=jnp.float32)
    h_node = jax.random.normal(k2, (N, embed_dim), dtype=jnp.float32)
    # Deterministic synthetic Linear(input_dim, embed_dim) parameters.
    w = 0.1 * jax.random.normal(k3, (input_dim, embed_dim), dtype=jnp.float32)
    b = 0.1 * jax.random.normal(k4, (embed_dim,), dtype=jnp.float32)

    assert int(ptr[-1]) == N, "segment_csr contract: ptr[-1] must equal N"

    ref = _reference(x_nodes, h_node, ptr, w, b)

    # Default path: single full-extent node tile, num_splits auto.
    out = jax.block_until_ready(dag_encoder_forward(x_nodes, h_node, ptr, w, b))
    assert out.shape == (ptr.shape[0] - 1, embed_dim)
    # Tolerance accounts for bf16 inputs/weights at the MXU (f32 accumulation).
    assert jnp.allclose(out, ref, atol=2e-2, rtol=2e-2), "mismatch vs reference"

    # Small-tile path: exercises the ragged boundary block + in-kernel row mask
    # and the per-split partial accumulators.
    out2 = jax.block_until_ready(
        dag_encoder_forward(x_nodes, h_node, ptr, w, b, tile_n=8, num_splits=2))
    assert jnp.allclose(out2, ref, atol=2e-2, rtol=2e-2), "mismatch (ragged path)"

    print("KERNEL_OK")
</pallas_src>

<mosaic_0001>
module attributes {stable_mosaic.version = 11 : i64} {
  func.func @_dag_encoder_kernel(%arg0: i32, %arg1: i32, %arg2: memref<3x1xi32, #tpu.memory_space<vmem>>, %arg3: memref<3x1xi32, #tpu.memory_space<vmem>>, %arg4: memref<12x6xf32, #tpu.memory_space<vmem>>, %arg5: memref<12x32xf32, #tpu.memory_space<vmem>>, %arg6: memref<38x32xbf16, #tpu.memory_space<vmem>>, %arg7: memref<1x32xf32, #tpu.memory_space<vmem>>, %arg8: memref<1x3x32xf32, #tpu.memory_space<vmem>>) attributes {dimension_semantics = [#tpu.dimension_semantics<parallel>, #tpu.dimension_semantics<arbitrary>], iteration_bounds = array<i64: 1, 1>, scalar_prefetch = 0 : i64, scratch_operands = 0 : i64, tpu.core_type = #tpu.core_type<tc>, window_params = [{pipeline_mode = #tpu.pipeline_mode<synchronous>, transform_indices = @transform_0, window_bounds = array<i64: 3, 1>}, {pipeline_mode = #tpu.pipeline_mode<synchronous>, transform_indices = @transform_1, window_bounds = array<i64: 3, 1>}, {transform_indices = @transform_2, window_bounds = array<i64: 12, 6>}, {transform_indices = @transform_3, window_bounds = array<i64: 12, 32>}, {pipeline_mode = #tpu.pipeline_mode<synchronous>, transform_indices = @transform_4, window_bounds = array<i64: 38, 32>}, {pipeline_mode = #tpu.pipeline_mode<synchronous>, transform_indices = @transform_5, window_bounds = array<i64: 1, 32>}, {transform_indices = @transform_6, window_bounds = array<i64: 1, 3, 32>}]} {
    %c0_i32 = arith.constant 0 : i32
    %0 = arith.cmpi eq, %arg1, %c0_i32 : i32
    %1 = arith.extui %0 : i1 to i32
    %c0_i32_0 = arith.constant 0 : i32
    %2 = arith.cmpi ne, %1, %c0_i32_0 : i32
    scf.if %2 {
      %cst_21 = arith.constant 0.000000e+00 : f32
      %43 = vector.broadcast %cst_21 : f32 to vector<3x32xf32>
      %c0_22 = arith.constant 0 : index
      %c0_23 = arith.constant 0 : index
      %c0_24 = arith.constant 0 : index
      %44 = vector.load %arg8[%c0_22, %c0_23, %c0_24] : memref<1x3x32xf32, #tpu.memory_space<vmem>>, vector<1x3x32xf32>
      %45 = vector.shape_cast %44 : vector<1x3x32xf32> to vector<3x32xf32>
      %46 = vector.shape_cast %43 : vector<3x32xf32> to vector<1x3x32xf32>
      tpu.vector_store %arg8[%c0_22, %c0_23, %c0_24], %46 {strides = array<i32>} : memref<1x3x32xf32, #tpu.memory_space<vmem>>, vector<1x3x32xf32>,
    } else {
    }
    %c1_i32 = arith.constant 1 : i32
    %3 = arith.muli %arg0, %c1_i32 : i32
    %4 = arith.addi %3, %arg1 : i32
    %c12_i32 = arith.constant 12 : i32
    %5 = arith.muli %4, %c12_i32 : i32
    %c0 = arith.constant 0 : index
    %c0_1 = arith.constant 0 : index
    %6 = vector.load %arg4[%c0, %c0_1] : memref<12x6xf32, #tpu.memory_space<vmem>>, vector<12x6xf32>
    %c0_2 = arith.constant 0 : index
    %c0_3 = arith.constant 0 : index
    %7 = vector.load %arg5[%c0_2, %c0_3] : memref<12x32xf32, #tpu.memory_space<vmem>>, vector<12x32xf32>
    %8 = tpu.concatenate %6, %7 in 1 : vector<12x6xf32>, vector<12x32xf32> -> vector<12x38xf32>
    %9 = arith.truncf %8 : vector<12x38xf32> to vector<12x38xbf16>
    %c0_4 = arith.constant 0 : index
    %c0_5 = arith.constant 0 : index
    %10 = vector.load %arg6[%c0_4, %c0_5] : memref<38x32xbf16, #tpu.memory_space<vmem>>, vector<38x32xbf16>
    %cst = arith.constant dense<0.000000e+00> : vector<12x32xf32>
    %11 = tpu.matmul %9, %10, %cst {dimension_numbers = #tpu.dot_dimension_numbers<[1], [0], [0], [1], [0, 0, 1, 1], [], []>} : vector<12x38xbf16>, vector<38x32xbf16>, vector<12x32xf32> -> vector<12x32xf32>
    %c0_6 = arith.constant 0 : index
    %c0_7 = arith.constant 0 : index
    %12 = vector.load %arg7[%c0_6, %c0_7] : memref<1x32xf32, #tpu.memory_space<vmem>>, vector<1x32xf32>
    %13 = vector.broadcast %12 : vector<1x32xf32> to vector<12x32xf32>
    %14 = arith.addf %11, %13 : vector<12x32xf32>
    %cst_8 = arith.constant 0.000000e+00 : f32
    %15 = vector.broadcast %cst_8 : f32 to vector<12x32xf32>
    %16 = arith.cmpf ogt, %14, %15 : vector<12x32xf32>
    %cst_9 = arith.constant 2.000000e-01 : f32
    %17 = vector.broadcast %cst_9 : f32 to vector<12x32xf32>
    %18 = arith.mulf %17, %14 : vector<12x32xf32>
    %19 = arith.select %16, %14, %18 : vector<12x32xi1>, vector<12x32xf32>
    %20 = arith.truncf %19 : vector<12x32xf32> to vector<12x32xbf16>
    %21 = tpu.iota {dimensions = array<i32: 1>} : vector<1x12xi32>
    %22 = vector.broadcast %5 : i32 to vector<1x12xi32>
    %23 = arith.addi %22, %21 : vector<1x12xi32>
    %c0_10 = arith.constant 0 : index
    %c0_11 = arith.constant 0 : index
    %24 = vector.load %arg2[%c0_10, %c0_11] : memref<3x1xi32, #tpu.memory_space<vmem>>, vector<3x1xi32>
    %25 = vector.broadcast %23 : vector<1x12xi32> to vector<3x12xi32>
    %26 = vector.broadcast %24 : vector<3x1xi32> to vector<3x12xi32>
    %27 = arith.cmpi sge, %25, %26 : vector<3x12xi32>
    %c0_12 = arith.constant 0 : index
    %c0_13 = arith.constant 0 : index
    %28 = vector.load %arg3[%c0_12, %c0_13] : memref<3x1xi32, #tpu.memory_space<vmem>>, vector<3x1xi32>
    %29 = vector.broadcast %23 : vector<1x12xi32> to vector<3x12xi32>
    %30 = vector.broadcast %28 : vector<3x1xi32> to vector<3x12xi32>
    %31 = arith.cmpi slt, %29, %30 : vector<3x12xi32>
    %32 = arith.andi %27, %31 : vector<3x12xi1>
    %33 = arith.extui %32 : vector<3x12xi1> to vector<3x12xi32>
    %34 = arith.sitofp %33 : vector<3x12xi32> to vector<3x12xf32>
    %35 = arith.truncf %34 : vector<3x12xf32> to vector<3x12xbf16>
    %c0_14 = arith.constant 0 : index
    %c0_15 = arith.constant 0 : index
    %c0_16 = arith.constant 0 : index
    %36 = vector.load %arg8[%c0_14, %c0_15, %c0_16] : memref<1x3x32xf32, #tpu.memory_space<vmem>>, vector<1x3x32xf32>
    %37 = vector.shape_cast %36 : vector<1x3x32xf32> to vector<3x32xf32>
    %cst_17 = arith.constant dense<0.000000e+00> : vector<3x32xf32>
    %38 = tpu.matmul %35, %20, %cst_17 {dimension_numbers = #tpu.dot_dimension_numbers<[1], [0], [0], [1], [0, 0, 1, 1], [], []>} : vector<3x12xbf16>, vector<12x32xbf16>, vector<3x32xf32> -> vector<3x32xf32>
    %39 = arith.addf %37, %38 : vector<3x32xf32>
    %c0_18 = arith.constant 0 : index
    %c0_19 = arith.constant 0 : index
    %c0_20 = arith.constant 0 : index
    %40 = vector.load %arg8[%c0_18, %c0_19, %c0_20] : memref<1x3x32xf32, #tpu.memory_space<vmem>>, vector<1x3x32xf32>
    %41 = vector.shape_cast %40 : vector<1x3x32xf32> to vector<3x32xf32>
    %42 = vector.shape_cast %39 : vector<3x32xf32> to vector<1x3x32xf32>
    tpu.vector_store %arg8[%c0_18, %c0_19, %c0_20], %42 {strides = array<i32>} : memref<1x3x32xf32, #tpu.memory_space<vmem>>, vector<1x3x32xf32>,
    return
  }
  func.func @transform_0(%arg0: i32, %arg1: i32) -> (i32, i32) {
    %c0_i32 = arith.constant 0 : i32
    %c0_i32_0 = arith.constant 0 : i32
    %c0_i32_1 = arith.constant 0 : i32
    return %c0_i32, %c0_i32_0 : i32, i32
  }
  func.func @transform_1(%arg0: i32, %arg1: i32) -> (i32, i32) {
    %c0_i32 = arith.constant 0 : i32
    %c0_i32_0 = arith.constant 0 : i32
    %c0_i32_1 = arith.constant 0 : i32
    return %c0_i32, %c0_i32_0 : i32, i32
  }
  func.func @transform_2(%arg0: i32, %arg1: i32) -> (i32, i32) {
    %c1_i32 = arith.constant 1 : i32
    %0 = arith.muli %arg0, %c1_i32 : i32
    %1 = arith.addi %0, %arg1 : i32
    %c0_i32 = arith.constant 0 : i32
    %2 = arith.minsi %1, %c0_i32 : i32
    %c0_i32_0 = arith.constant 0 : i32
    %c0_i32_1 = arith.constant 0 : i32
    return %2, %c0_i32_0 : i32, i32
  }
  func.func @transform_3(%arg0: i32, %arg1: i32) -> (i32, i32) {
    %c1_i32 = arith.constant 1 : i32
    %0 = arith.muli %arg0, %c1_i32 : i32
    %1 = arith.addi %0, %arg1 : i32
    %c0_i32 = arith.constant 0 : i32
    %2 = arith.minsi %1, %c0_i32 : i32
    %c0_i32_0 = arith.constant 0 : i32
    %c0_i32_1 = arith.constant 0 : i32
    return %2, %c0_i32_0 : i32, i32
  }
  func.func @transform_4(%arg0: i32, %arg1: i32) -> (i32, i32) {
    %c0_i32 = arith.constant 0 : i32
    %c0_i32_0 = arith.constant 0 : i32
    %c0_i32_1 = arith.constant 0 : i32
    return %c0_i32, %c0_i32_0 : i32, i32
  }
  func.func @transform_5(%arg0: i32, %arg1: i32) -> (i32, i32) {
    %c0_i32 = arith.constant 0 : i32
    %c0_i32_0 = arith.constant 0 : i32
    %c0_i32_1 = arith.constant 0 : i32
    return %c0_i32, %c0_i32_0 : i32, i32
  }
  func.func @transform_6(%arg0: i32, %arg1: i32) -> (i32, i32, i32) {
    %c0_i32 = arith.constant 0 : i32
    %c0_i32_0 = arith.constant 0 : i32
    %c0_i32_1 = arith.constant 0 : i32
    return %arg0, %c0_i32, %c0_i32_0 : i32, i32, i32
  }
}

</mosaic_0001>

<llo_original>
// kernel: _dag_encoder_forward_impl.1
$region0: #{_dag_encoder_forward_impl.1}
  #allocation0 [shape = 'u32[]', space=smem, size = 0x4, offset = 0x4, fixed_abs, tag = 'smem constant byte address 0x4 - core index']
  #allocation1 [shape = 'u32[144,128]{1,0:T(1,128)}', space=vmem, size = 0x12000, scoped, tag = 'internal scratch']
  %s0 = inlined_call_operand.vmem [shape: s32[3,1], index: 0, kind: input, shape index: {}]
  %s1 = inlined_call_operand.vmem [shape: s32[3,1], index: 1, kind: input, shape index: {}]
  %s2 = inlined_call_operand.vmem [shape: f32[12,6], index: 2, kind: input, shape index: {}]
  %s3 = inlined_call_operand.vmem [shape: f32[12,32], index: 3, kind: input, shape index: {}]
  %s4 = inlined_call_operand.vmem [shape: bf16[38,32], index: 4, kind: input, shape index: {}]
  %s5 = inlined_call_operand.vmem [shape: f32[1,32], index: 5, kind: input, shape index: {}]
  %s6 = inlined_call_operand.hbm [shape: f32[1,3,32], index: 6, kind: output, shape index: {}]
  %s7 = sld [smem:[#allocation0]]
  $region38: #{_dag_encoder_forward_impl.1} parent=0
    _
  %s9 = ssub.s32 1, %s7
  %s10 = scalar_select 0, %s9, %s7
  $region1: #{_dag_encoder_forward_impl.1} parent=0
    #allocation2 [shape = 'u8[2048]{0}', space=vmem, size = 0x800, scoped, tag = 'output window, operand 0, single buffered']
    #allocation3 [shape = 's32[1]{0}', space=sflag, size = 0x4, scoped, tag = 'scoped memory for _dag_encoder_forward_impl.1']
    %11 = vsyncpa [#allocation3], 0
    // Predicated region
    $region2: #{_dag_encoder_forward_impl.1} parent=1 // pred_check
      _
    $region3: #{_dag_encoder_forward_impl.1} parent=1 // pred_check_branch
      %13 = sbr.rel (0) target = $region5
    $region4: #{_dag_encoder_forward_impl.1} parent=1 // pred_region
      _
    $region5: #{_dag_encoder_forward_impl.1} parent=1 // pred_fallthru
      _
    // Predicated region
    $region6: #{_dag_encoder_forward_impl.1} parent=1 // pred_check
      _
    $region7: #{_dag_encoder_forward_impl.1} parent=1 // pred_check_branch
      %15 = sbr.rel (0) target = $region9
    $region8: #{_dag_encoder_forward_impl.1} parent=1 // pred_region
      _
    $region9: #{_dag_encoder_forward_impl.1} parent=1 // pred_fallthru
      _
    // Predicated region
    $region10: #{_dag_encoder_forward_impl.1} parent=1 // pred_check
      _
    $region11: #{_dag_encoder_forward_impl.1} parent=1 // pred_check_branch
      %17 = sbr.rel (0) target = $region13
    $region12: #{_dag_encoder_forward_impl.1} parent=1 // pred_region
      %s18 = sadd.s32 0, 0
      %p19 = scmp.lt.s32.totalorder %s18, 0
      %s20 = scalar_select %p19, %s18, 0
      %s21 = smul.u32 2, %s20
      %p22 = scmp.lt.s32.totalorder %s21, 1
      %s23 = scalar_select %p22, %s21, 1
      %s24 = smul.addr %s23, 8
      %s25 = scalar_lea.vmem %s2, %s24
      %s26 = sadd.s32 0, 0
      %p27 = scmp.lt.s32.totalorder %s26, 0
      %s28 = scalar_select %p27, %s26, 0
      %s29 = smul.u32 2, %s28
    $region13: #{_dag_encoder_forward_impl.1} parent=1 // pred_fallthru
      _
    // Predicated region
    $region14: #{_dag_encoder_forward_impl.1} parent=1 // pred_check
      _
    $region15: #{_dag_encoder_forward_impl.1} parent=1 // pred_check_branch
      %31 = sbr.rel (0) target = $region17
    $region16: #{_dag_encoder_forward_impl.1} parent=1 // pred_region
      %s32 = sadd.s32 0, 0
      %p33 = scmp.lt.s32.totalorder %s32, 0
      %s34 = scalar_select %p33, %s32, 0
      %s35 = smul.u32 2, %s34
      %p36 = scmp.lt.s32.totalorder %s35, 1
      %s37 = scalar_select %p36, %s35, 1
      %s38 = smul.addr %s37, 8
      %s39 = scalar_lea.vmem %s3, %s38
      %s40 = sadd.s32 0, 0
      %p41 = scmp.lt.s32.totalorder %s40, 0
      %s42 = scalar_select %p41, %s40, 0
      %s43 = smul.u32 2, %s42
    $region17: #{_dag_encoder_forward_impl.1} parent=1 // pred_fallthru
      _
    // Predicated region
    $region18: #{_dag_encoder_forward_impl.1} parent=1 // pred_check
      _
    $region19: #{_dag_encoder_forward_impl.1} parent=1 // pred_check_branch
      %45 = sbr.rel (0) target = $region21
    $region20: #{_dag_encoder_forward_impl.1} parent=1 // pred_region
      _
    $region21: #{_dag_encoder_forward_impl.1} parent=1 // pred_fallthru
      _
    // Predicated region
    $region22: #{_dag_encoder_forward_impl.1} parent=1 // pred_check
      _
    $region23: #{_dag_encoder_forward_impl.1} parent=1 // pred_check_branch
      %47 = sbr.rel (0) target = $region25
    $region24: #{_dag_encoder_forward_impl.1} parent=1 // pred_region
      _
    $region25: #{_dag_encoder_forward_impl.1} parent=1 // pred_fallthru
      _
    %s48 = sadd.s32 0, 0
    %p49 = scmp.lt.s32.totalorder %s48, 0
    %s50 = scalar_select %p49, %s48, 0
    %s51 = smul.u32 2, %s50
    %p52 = scmp.lt.s32.totalorder %s51, 1
    %s53 = scalar_select %p52, %s51, 1
    %s54 = smul.addr %s53, 8
    %s55 = scalar_lea.vmem %s2, %s54
    %s56 = sadd.s32 0, 0
    %p57 = scmp.lt.s32.totalorder %s56, 0
    %s58 = scalar_select %p57, %s56, 0
    %s59 = smul.u32 2, %s58
    %p60 = scmp.lt.s32.totalorder %s59, 1
    %s61 = scalar_select %p60, %s59, 1
    %s62 = smul.addr %s61, 8
    %s63 = scalar_lea.vmem %s3, %s62
    %s64 = sadd.s32 0, 0
    %p65 = scmp.lt.s32.totalorder %s64, 0
    %s66 = scalar_select %p65, %s64, 0
    %s67 = smul.u32 2, %s66
    %p68 = scmp.lt.s32.totalorder %s67, 1
    %s69 = scalar_select %p68, %s67, 1
    %s70 = smul.addr %s69, 8
    %s71 = scalar_lea.vmem %s2, %s70
    %s72 = sadd.s32 0, 0
    %p73 = scmp.lt.s32.totalorder %s72, 0
    %s74 = scalar_select %p73, %s72, 0
    %s75 = smul.u32 2, %s74
    %s76 = sadd.s32 0, 0
    %p77 = scmp.lt.s32.totalorder %s76, 0
    %s78 = scalar_select %p77, %s76, 0
    %s79 = smul.u32 2, %s78
    %p80 = scmp.lt.s32.totalorder %s79, 1
    %s81 = scalar_select %p80, %s79, 1
    %s82 = smul.addr %s81, 8
    %s83 = scalar_lea.vmem %s3, %s82
    %s84 = sadd.s32 0, 0
    %p85 = scmp.lt.s32.totalorder %s84, 0
    %s86 = scalar_select %p85, %s84, 0
    %s87 = smul.u32 2, %s86
    %p89 = scmp.eq.s32.totalorder 0, 0
    // Predicated region
    $region26: #{_dag_encoder_forward_impl.1} parent=1 // pred_check
      %p90 = pneg %p89
    $region27: #{_dag_encoder_forward_impl.1} parent=1 // pred_check_branch
      %92 = sbr.rel (%p90) target = $region29
    $region28: #{_dag_encoder_forward_impl.1} parent=1 // pred_region
      %vm93 = vcmask 256000
      %94 = vst.msk [vmem:[#allocation2] sm:$0x7] %vm93, 0.0
    $region29: #{_dag_encoder_forward_impl.1} parent=1 // pred_fallthru
      _
    %s95 = sadd.s32 0, 0
    %s96 = smul.u32 %s95, 12
    %v97 = vld [vmem:[%s71] sm:$0xff]
    %v98 = vld [vmem:[%s71 + $0x8] sm:$0xf]
    %v99 = vld [vmem:[%s83] sm:$0xff]
    %v100 = vld [vmem:[%s83 + $0x8] sm:$0xf]
    %103 = vrot.lane.b32.xlu0 %v99, 6
    %v104 = vpop.permute.xlu0 %103
    %105 = vrot.lane.b32.xlu0 %v100, 6
    %v106 = vpop.permute.xlu0 %105
    %vm109 = vcmask 48128
    %v110 = vsel %vm109, %v97, %v104
    %v111 = vsel %vm109, %v98, %v106
    %v112 = vpack.c.bf16 %v111, %v110
    %v113 = vld [vmem:[%s4] sm:$0xf]
    %v114 = vld [vmem:[%s4 + $0x4] sm:$0xf]
    %v115 = vld [vmem:[%s4 + $0x8] sm:$0xf]
    %v116 = vld [vmem:[%s4 + $0xc] sm:$0xf]
    %v117 = vld [vmem:[%s4 + $0x10] sm:$0x7]
    %v118 = vld [vmem:[%s5] sm:$0x1]
    %v120 = vlaneseq
    %v121 = vshrl.u32 %v120, 7
    %v122 = vsub.s32 0, %v121
    %v123 = vrot.slane %v118, %v122
    %v130 = vunpack.c.l.b16 %v113
    %v131 = vunpack.c.l.b16 %v114
    %v132 = vunpack.c.l.b16 %v115
    %v133 = vunpack.c.l.b16 %v116
    %v134 = vunpack.c.l.b16 %v117
    %v135 = vpack.c.b16 %v131, %v130
    %v136 = vpack.c.b16 %v133, %v132
    %v137 = vpack.c.b16 %v134, %v134
    %vm140 = vcmask 310272
    %v142 = vsel %vm140, %v112, 0
    %vm144 = vcmask 1042432
    %v146 = vsel %vm144, %v137, 0
    %148 = vmatprep.subr.bf16.mxu0 0
    %149 = vmatpush1.bf16.msra.mxu0 %v135
    %150 = vmatprep.subr.bf16.mxu0 0
    %151 = vmatpush1.bf16.msra.mxu0 %v136
    %152 = vmatprep.subr.bf16.mxu0 0
    %153 = vmatpush1.bf16.msra.mxu0 %v146
    %154 = vmatprep.subr.bf16.mxu0 0
    %155 = vmatpush1.bf16.msra.mxu0 0
    %156 = vmatprep.subr.bf16.mxu0 0
    %157 = vmatpush1.bf16.msra.mxu0 0
    %158 = vmatprep.subr.bf16.mxu0 0
    %159 = vmatpush1.bf16.msra.mxu0 0
    %160 = vmatprep.subr.bf16.mxu0 0
    %161 = vmatpush1.bf16.msra.mxu0 0
    %162 = vmatprep.subr.bf16.mxu0 0
    %163 = vmatpush1.bf16.msra.mxu0 0
    %164 = vmatprep.subr.bf16.mxu0 0
    %165 = vmatpush1.bf16.msra.mxu0 0
    %166 = vmatprep.subr.bf16.mxu0 0
    %167 = vmatpush1.bf16.msra.mxu0 0
    %168 = vmatprep.subr.bf16.mxu0 0
    %169 = vmatpush1.bf16.msra.mxu0 0
    %170 = vmatprep.subr.bf16.mxu0 0
    %171 = vmatpush1.bf16.msra.mxu0 0
    %172 = vmatprep.subr.bf16.mxu0 0
    %173 = vmatpush1.bf16.msra.mxu0 0
    %174 = vmatprep.subr.bf16.mxu0 0
    %175 = vmatpush1.bf16.msra.mxu0 0
    %176 = vmatprep.subr.bf16.mxu0 0
    %177 = vmatpush1.bf16.msra.mxu0 0
    %178 = vmatprep.subr.bf16.mxu0 0
    %179 = vmatpush1.bf16.msra.mxu0 0
    %180 = vmatprep.mubr.bf16.mxu0 0
    %181 = vmatmul.mubr.bf16.gmra.mrb[0].mxu0 %v142
    %v182 = vpop.f32.mrb[0].mxu0
    %v183 = vadd.f32 %v123, %v182
    %v184 = vpop.f32.mrb[0].mxu0
    %v185 = vpop.f32.mrb[0].mxu0
    %v186 = vadd.f32 %v123, %v185
    %v187 = vpop.f32.mrb[0].mxu0
    %188 = vdwg.mxu0
    %vm189 = vcmp.gt.f32.partialorder %v183, 0.0
    %vm190 = vcmp.gt.f32.partialorder %v186, 0.0
    %v191 = vmul.f32 %v183, 0.2
    %v192 = vmul.f32 %v186, 0.2
    %v193 = vsel %vm189, %v183, %v191
    %v194 = vsel %vm190, %v186, %v192
    %v195 = vpack.c.bf16 %v194, %v193
    %v196 = vlaneseq
    %v197 = vand.u32 %v196, 127
    %v198 = vstv %s96
    %v199 = vadd.s32 %v198, %v197
    %v200 = vld [vmem:[%s0] sm:$0x7]
    %201 = vset.pattern.permute.xlu0 0
    %202 = vperm.xlu0 %201, %v200
    %v203 = vpop.permute.xlu0 %202
    %vm204 = vcmp.ge.s32.totalorder %v199, %v203
    %v205 = vld [vmem:[%s1] sm:$0x7]
    %206 = vset.pattern.permute.xlu0 0
    %207 = vperm.xlu0 %206, %v205
    %v208 = vpop.permute.xlu0 %207
    %vm209 = vcmp.lt.s32.totalorder %v199, %v208
    %vm210 = vmand %vm204, %vm209
    %v211 = vsel %vm210, 1, 0
    %v212 = vcvt.s32.f32 %v211
    %v213 = vpack.c.bf16 %v212, %v212
    %v214 = vld [vmem:[#allocation2] sm:$0x7]
    %vm215 = vcmask 97280
    %v217 = vsel %vm215, %v213, 0
    %vm219 = vcmask 1045504
    %v221 = vsel %vm219, %v195, 0
    %223 = vmatprep.subr.bf16.mxu0 0
    %224 = vmatpush1.bf16.msra.mxu0 %v221
    %225 = vmatprep.subr.bf16.mxu0 0
    %226 = vmatpush1.bf16.msra.mxu0 0
    %227 = vmatprep.subr.bf16.mxu0 0
    %228 = vmatpush1.bf16.msra.mxu0 0
    %229 = vmatprep.subr.bf16.mxu0 0
    %230 = vmatpush1.bf16.msra.mxu0 0
    %231 = vmatprep.subr.bf16.mxu0 0
    %232 = vmatpush1.bf16.msra.mxu0 0
    %233 = vmatprep.subr.bf16.mxu0 0
    %234 = vmatpush1.bf16.msra.mxu0 0
    %235 = vmatprep.subr.bf16.mxu0 0
    %236 = vmatpush1.bf16.msra.mxu0 0
    %237 = vmatprep.subr.bf16.mxu0 0
    %238 = vmatpush1.bf16.msra.mxu0 0
    %239 = vmatprep.subr.bf16.mxu0 0
    %240 = vmatpush1.bf16.msra.mxu0 0
    %241 = vmatprep.subr.bf16.mxu0 0
    %242 = vmatpush1.bf16.msra.mxu0 0
    %243 = vmatprep.subr.bf16.mxu0 0
    %244 = vmatpush1.bf16.msra.mxu0 0
    %245 = vmatprep.subr.bf16.mxu0 0
    %246 = vmatpush1.bf16.msra.mxu0 0
    %247 = vmatprep.subr.bf16.mxu0 0
    %248 = vmatpush1.bf16.msra.mxu0 0
    %249 = vmatprep.subr.bf16.mxu0 0
    %250 = vmatpush1.bf16.msra.mxu0 0
    %251 = vmatprep.subr.bf16.mxu0 0
    %252 = vmatpush1.bf16.msra.mxu0 0
    %253 = vmatprep.subr.bf16.mxu0 0
    %254 = vmatpush1.bf16.msra.mxu0 0
    %255 = vmatprep.mubr.bf16.mxu0 0
    %256 = vmatmul.mubr.bf16.gmra.mrb[0].mxu0 %v217
    %v257 = vpop.f32.mrb[0].mxu0
    %v258 = vadd.f32 0.0, %v257
    %v259 = vpop.f32.mrb[0].mxu0
    %v260 = vpop.f32.mrb[0].mxu0
    %v261 = vpop.f32.mrb[0].mxu0
    %262 = vdwg.mxu0
    %v263 = vadd.f32 %v214, %v258
    %vm264 = vcmask 256000
    %265 = vst.msk [vmem:[#allocation2] sm:$0x7] %vm264, %v263
    // Predicated region
    $region30: #{_dag_encoder_forward_impl.1} parent=1 // pred_check
      _
    $region31: #{_dag_encoder_forward_impl.1} parent=1 // pred_check_branch
      %267 = sbr.rel (0) target = $region33
    $region32: #{_dag_encoder_forward_impl.1} parent=1 // pred_region
      %s269 = ssub.s32 64, 64
      %270 = vsyncadd [#allocation3], %s269
      %s272 = sshll.u32 [#allocation2], 4
      %s273 = int_to_ptr.vmem [resolvable:$true] %s272
      %275 = dma.vmem_to_hbm [thread:$0]  %s273, 64, %s6, [#allocation3]
    $region33: #{_dag_encoder_forward_impl.1} parent=1 // pred_fallthru
      _
    // Predicated region
    $region34: #{_dag_encoder_forward_impl.1} parent=1 // pred_check
      _
    $region35: #{_dag_encoder_forward_impl.1} parent=1 // pred_check_branch
      %277 = sbr.rel (0) target = $region37
    $region36: #{_dag_encoder_forward_impl.1} parent=1 // pred_region
      %278 = dma.done [#allocation3], 64
    $region37: #{_dag_encoder_forward_impl.1} parent=1 // pred_fallthru
      _
    %279 = vsyncpa [#allocation3], 1

</llo_original>
